<compile_context>
chip_gen: v7x
topology: tpu7x:2x2x1
jax: 0.10.0
libtpu: 0.0.40
codegen_flags: <defaults>
</compile_context>

<pallas_src>
import functools

import jax
import jax.numpy as jnp
import numpy as np
from jax.experimental import pallas as pl
from jax.experimental.pallas import tpu as pltpu


def _mculora_kernel(task_cols,
                    x_ref, wt_ref, b_ref, a_all_ref, scale_ref, b_blk_ref,
                    main_ref, task_ref):
    """Single-step kernel: everything lives in VMEM as whole blocks.

    task_cols = T * OUT (static); columns [0, task_cols) of the block-diagonal
    LoRA product are the per-task outputs, the remaining OUT columns are the
    shared-LoRA contribution added to the pretrained output.
    """
    x = x_ref[...]

    # Rank-space activations for ALL LoRA branches in one MXU pass,
    # scaled per-branch: h[:, g*R:(g+1)*R] = (x @ A_g.T) * scale_g
    h = (jnp.dot(x, a_all_ref[...], preferred_element_type=jnp.float32)
         * scale_ref[...])

    # Block-diagonal B: one MXU pass produces [task0 | ... | task7 | shared].
    lora_all = jnp.dot(h, b_blk_ref[...], preferred_element_type=jnp.float32)

    # Lane-dense per-task slab (width T*OUT, a multiple of 128).
    task_ref[...] = lora_all[:, :task_cols].astype(task_ref.dtype)

    # Main output: pretrained (x @ W.T + b) + shared-LoRA columns.
    main = (jnp.dot(x, wt_ref[...], preferred_element_type=jnp.float32)
            + b_ref[...] + lora_all[:, task_cols:])
    main_ref[...] = main.astype(main_ref.dtype)


def mculora_linear_forward(x, w, b, lora_shared_A, lora_shared_B,
                           lora_tasks_A, lora_tasks_B,
                           lora_shared_scale, lora_task_scale, tasks):
    """Pallas implementation of MCULoRALinear.forward (x_tasks=None path).

    Returns (out_main, {task_name: lora_task_output}).
    """
    M, IN = x.shape
    OUT = w.shape[0]
    T, R, _ = lora_tasks_A.shape
    G = T + 1  # task branches + shared branch
    dtype = x.dtype

    # ---- wrapper-side layout plumbing (XLA, outside the kernel hot path) ----
    wt = w.T                              # (IN, OUT)  -- no in-kernel transpose
    b2 = b.reshape(1, OUT)

    # Stack LoRA A's (tasks first, shared last) -> (IN, G*R).
    a_stack = jnp.concatenate([lora_tasks_A, lora_shared_A[None]], axis=0)
    a_all = a_stack.reshape(G * R, IN).T  # column g*R + r == A_g row r

    # Per-branch scales broadcast over their R rank columns -> (1, G*R).
    task_scales = jnp.repeat(jnp.asarray(lora_task_scale, jnp.float32), R)
    shared_scales = jnp.broadcast_to(
        jnp.asarray(lora_shared_scale, jnp.float32), (R,))
    scale_row = jnp.concatenate([task_scales, shared_scales]).reshape(1, G * R)

    # Block-diagonal B -> (G*R, G*OUT): block g maps branch g's rank columns
    # to its own OUT-wide output slot.
    b_stack = jnp.concatenate([lora_tasks_B, lora_shared_B[None]], axis=0)
    b_t = jnp.transpose(b_stack, (0, 2, 1))            # (G, R, OUT)
    eye = jnp.eye(G, dtype=b_t.dtype)
    b_blk = (b_t[:, :, None, :] * eye[:, None, :, None]).reshape(G * R, G * OUT)

    kernel = functools.partial(_mculora_kernel, T * OUT)

    main, task_slab = pl.pallas_call(
        kernel,
        out_shape=(
            jax.ShapeDtypeStruct((M, OUT), dtype),
            jax.ShapeDtypeStruct((M, T * OUT), dtype),
        ),
        grid_spec=pltpu.PrefetchScalarGridSpec(
            num_scalar_prefetch=0,
            grid=(1,),
            in_specs=[
                pl.BlockSpec((M, IN), lambda i: (0, 0)),           # x
                pl.BlockSpec((IN, OUT), lambda i: (0, 0)),         # W.T
                pl.BlockSpec((1, OUT), lambda i: (0, 0)),          # bias
                pl.BlockSpec((IN, G * R), lambda i: (0, 0)),       # stacked A.T
                pl.BlockSpec((1, G * R), lambda i: (0, 0)),        # scale row
                pl.BlockSpec((G * R, G * OUT), lambda i: (0, 0)),  # block-diag B
            ],
            out_specs=[
                pl.BlockSpec((M, OUT), lambda i: (0, 0)),          # main
                pl.BlockSpec((M, T * OUT), lambda i: (0, 0)),      # task slab
            ],
        ),
        compiler_params=pltpu.CompilerParams(
            dimension_semantics=("arbitrary",)),
    )(x, wt, b2, a_all, scale_row, b_blk)

    lora_tasks = {task: task_slab[:, i * OUT:(i + 1) * OUT]
                  for i, task in enumerate(tasks)}
    return main, lora_tasks


def _reference(x, w, b, A_s, B_s, A_t, B_t, s_shared, s_task):
    pretrained = x @ w.T + b
    lora = (x @ A_s.T) @ B_s.T * s_shared
    main = pretrained + lora
    tasks = jnp.stack(
        [((x @ A_t[i].T) @ B_t[i].T) * s_task[i] for i in range(A_t.shape[0])])
    return main, tasks


if __name__ == "__main__":
    # Module config: in_features=32, out_features=32, r={task: 4}, 8 tasks.
    IN, OUT, R, T, BATCH = 32, 32, 4, 8, 8
    tasks = tuple(str(i) for i in range(T))
    lora_shared_scale = jnp.float32(0.5)
    # TODO(synk): lora_dropout > 0.0 (nn.Dropout on the LoRA input) not implemented;
    # default config uses dropout=0.0 (identity), which is what is modeled here.

    key = jax.random.PRNGKey(0)
    ks = jax.random.split(key, 8)

    bound_w = 1.0 / np.sqrt(IN)   # PyTorch Linear default init bound
    bound_a = 1.0 / np.sqrt(IN)   # kaiming_uniform(a=sqrt(5)) -> 1/sqrt(fan_in)

    x = jax.random.normal(ks[0], (BATCH, IN), dtype=jnp.float32)
    w = jax.random.uniform(ks[1], (OUT, IN), jnp.float32, -bound_w, bound_w)
    b = jax.random.uniform(ks[2], (OUT,), jnp.float32, -bound_w, bound_w)
    lora_shared_A = jax.random.uniform(ks[3], (R, IN), jnp.float32, -bound_a, bound_a)
    # Module init zeros the B matrices; use small random values instead so the
    # LoRA branches produce non-trivial output for verification.
    lora_shared_B = 0.05 * jax.random.normal(ks[4], (OUT, R), dtype=jnp.float32)
    lora_tasks_A = jax.random.uniform(ks[5], (T, R, IN), jnp.float32, -bound_a, bound_a)
    lora_tasks_B = 0.05 * jax.random.normal(ks[6], (T, OUT, R), dtype=jnp.float32)
    lora_task_scale = 0.5 + 0.1 * jnp.arange(T, dtype=jnp.float32)

    fwd = jax.jit(mculora_linear_forward, static_argnames=("tasks",))
    main, lora_tasks = fwd(x, w, b, lora_shared_A, lora_shared_B,
                           lora_tasks_A, lora_tasks_B,
                           lora_shared_scale, lora_task_scale, tasks=tasks)
    jax.block_until_ready(main)
    for v in lora_tasks.values():
        jax.block_until_ready(v)

    # Correctness check against a pure-JAX reference.
    ref_main, ref_tasks = _reference(
        x, w, b, lora_shared_A, lora_shared_B,
        lora_tasks_A, lora_tasks_B, lora_shared_scale, lora_task_scale)
    np.testing.assert_allclose(np.asarray(main), np.asarray(ref_main),
                               rtol=5e-5, atol=5e-5)
    for i, task in enumerate(tasks):
        np.testing.assert_allclose(np.asarray(lora_tasks[task]),
                                   np.asarray(ref_tasks[i]),
                                   rtol=5e-5, atol=5e-5)

    print("KERNEL_OK")
</pallas_src>

<mosaic_0001>
module attributes {stable_mosaic.version = 11 : i64} {
  func.func @_mculora_kernel(%arg0: i32, %arg1: memref<8x32xf32, #tpu.memory_space<vmem>>, %arg2: memref<32x32xf32, #tpu.memory_space<vmem>>, %arg3: memref<1x32xf32, #tpu.memory_space<vmem>>, %arg4: memref<32x36xf32, #tpu.memory_space<vmem>>, %arg5: memref<1x36xf32, #tpu.memory_space<vmem>>, %arg6: memref<36x288xf32, #tpu.memory_space<vmem>>, %arg7: memref<8x32xf32, #tpu.memory_space<vmem>>, %arg8: memref<8x256xf32, #tpu.memory_space<vmem>>) attributes {dimension_semantics = [#tpu.dimension_semantics<arbitrary>], iteration_bounds = array<i64: 1>, scalar_prefetch = 0 : i64, scratch_operands = 0 : i64, tpu.core_type = #tpu.core_type<tc>, window_params = [{pipeline_mode = #tpu.pipeline_mode<synchronous>, transform_indices = @transform_0, window_bounds = array<i64: 8, 32>}, {pipeline_mode = #tpu.pipeline_mode<synchronous>, transform_indices = @transform_1, window_bounds = array<i64: 32, 32>}, {pipeline_mode = #tpu.pipeline_mode<synchronous>, transform_indices = @transform_2, window_bounds = array<i64: 1, 32>}, {pipeline_mode = #tpu.pipeline_mode<synchronous>, transform_indices = @transform_3, window_bounds = array<i64: 32, 36>}, {pipeline_mode = #tpu.pipeline_mode<synchronous>, transform_indices = @transform_4, window_bounds = array<i64: 1, 36>}, {pipeline_mode = #tpu.pipeline_mode<synchronous>, transform_indices = @transform_5, window_bounds = array<i64: 36, 288>}, {pipeline_mode = #tpu.pipeline_mode<synchronous>, transform_indices = @transform_6, window_bounds = array<i64: 8, 32>}, {pipeline_mode = #tpu.pipeline_mode<synchronous>, transform_indices = @transform_7, window_bounds = array<i64: 8, 256>}]} {
    %c0 = arith.constant 0 : index
    %c0_0 = arith.constant 0 : index
    %0 = vector.load %arg1[%c0, %c0_0] : memref<8x32xf32, #tpu.memory_space<vmem>>, vector<8x32xf32>
    %c0_1 = arith.constant 0 : index
    %c0_2 = arith.constant 0 : index
    %1 = vector.load %arg4[%c0_1, %c0_2] : memref<32x36xf32, #tpu.memory_space<vmem>>, vector<32x36xf32>
    %cst = arith.constant dense<0.000000e+00> : vector<8x36xf32>
    %2 = tpu.matmul %0, %1, %cst {dimension_numbers = #tpu.dot_dimension_numbers<[1], [0], [0], [1], [0, 0, 1, 1], [], []>} : vector<8x32xf32>, vector<32x36xf32>, vector<8x36xf32> -> vector<8x36xf32>
    %c0_3 = arith.constant 0 : index
    %c0_4 = arith.constant 0 : index
    %3 = vector.load %arg5[%c0_3, %c0_4] : memref<1x36xf32, #tpu.memory_space<vmem>>, vector<1x36xf32>
    %4 = vector.broadcast %3 : vector<1x36xf32> to vector<8x36xf32>
    %5 = arith.mulf %2, %4 : vector<8x36xf32>
    %c0_5 = arith.constant 0 : index
    %c0_6 = arith.constant 0 : index
    %6 = vector.load %arg6[%c0_5, %c0_6] : memref<36x288xf32, #tpu.memory_space<vmem>>, vector<36x288xf32>
    %cst_7 = arith.constant dense<0.000000e+00> : vector<8x288xf32>
    %7 = tpu.matmul %5, %6, %cst_7 {dimension_numbers = #tpu.dot_dimension_numbers<[1], [0], [0], [1], [0, 0, 1, 1], [], []>} : vector<8x36xf32>, vector<36x288xf32>, vector<8x288xf32> -> vector<8x288xf32>
    %8 = vector.extract_strided_slice %7 {offsets = [0, 0], sizes = [8, 256], strides = [1, 1]} : vector<8x288xf32> to vector<8x256xf32>
    %c0_8 = arith.constant 0 : index
    %c0_9 = arith.constant 0 : index
    %9 = vector.load %arg8[%c0_8, %c0_9] : memref<8x256xf32, #tpu.memory_space<vmem>>, vector<8x256xf32>
    tpu.vector_store %arg8[%c0_8, %c0_9], %8 {strides = array<i32>} : memref<8x256xf32, #tpu.memory_space<vmem>>, vector<8x256xf32>,
    %c0_10 = arith.constant 0 : index
    %c0_11 = arith.constant 0 : index
    %10 = vector.load %arg2[%c0_10, %c0_11] : memref<32x32xf32, #tpu.memory_space<vmem>>, vector<32x32xf32>
    %cst_12 = arith.constant dense<0.000000e+00> : vector<8x32xf32>
    %11 = tpu.matmul %0, %10, %cst_12 {dimension_numbers = #tpu.dot_dimension_numbers<[1], [0], [0], [1], [0, 0, 1, 1], [], []>} : vector<8x32xf32>, vector<32x32xf32>, vector<8x32xf32> -> vector<8x32xf32>
    %c0_13 = arith.constant 0 : index
    %c0_14 = arith.constant 0 : index
    %12 = vector.load %arg3[%c0_13, %c0_14] : memref<1x32xf32, #tpu.memory_space<vmem>>, vector<1x32xf32>
    %13 = vector.broadcast %12 : vector<1x32xf32> to vector<8x32xf32>
    %14 = arith.addf %11, %13 : vector<8x32xf32>
    %15 = vector.extract_strided_slice %7 {offsets = [0, 256], sizes = [8, 32], strides = [1, 1]} : vector<8x288xf32> to vector<8x32xf32>
    %16 = arith.addf %14, %15 : vector<8x32xf32>
    %c0_15 = arith.constant 0 : index
    %c0_16 = arith.constant 0 : index
    %17 = vector.load %arg7[%c0_15, %c0_16] : memref<8x32xf32, #tpu.memory_space<vmem>>, vector<8x32xf32>
    tpu.vector_store %arg7[%c0_15, %c0_16], %16 {strides = array<i32>} : memref<8x32xf32, #tpu.memory_space<vmem>>, vector<8x32xf32>,
    return
  }
  func.func @transform_0(%arg0: i32) -> (i32, i32) {
    %c0_i32 = arith.constant 0 : i32
    %c0_i32_0 = arith.constant 0 : i32
    %c0_i32_1 = arith.constant 0 : i32
    return %c0_i32, %c0_i32_0 : i32, i32
  }
  func.func @transform_1(%arg0: i32) -> (i32, i32) {
    %c0_i32 = arith.constant 0 : i32
    %c0_i32_0 = arith.constant 0 : i32
    %c0_i32_1 = arith.constant 0 : i32
    return %c0_i32, %c0_i32_0 : i32, i32
  }
  func.func @transform_2(%arg0: i32) -> (i32, i32) {
    %c0_i32 = arith.constant 0 : i32
    %c0_i32_0 = arith.constant 0 : i32
    %c0_i32_1 = arith.constant 0 : i32
    return %c0_i32, %c0_i32_0 : i32, i32
  }
  func.func @transform_3(%arg0: i32) -> (i32, i32) {
    %c0_i32 = arith.constant 0 : i32
    %c0_i32_0 = arith.constant 0 : i32
    %c0_i32_1 = arith.constant 0 : i32
    return %c0_i32, %c0_i32_0 : i32, i32
  }
  func.func @transform_4(%arg0: i32) -> (i32, i32) {
    %c0_i32 = arith.constant 0 : i32
    %c0_i32_0 = arith.constant 0 : i32
    %c0_i32_1 = arith.constant 0 : i32
    return %c0_i32, %c0_i32_0 : i32, i32
  }
  func.func @transform_5(%arg0: i32) -> (i32, i32) {
    %c0_i32 = arith.constant 0 : i32
    %c0_i32_0 = arith.constant 0 : i32
    %c0_i32_1 = arith.constant 0 : i32
    return %c0_i32, %c0_i32_0 : i32, i32
  }
  func.func @transform_6(%arg0: i32) -> (i32, i32) {
    %c0_i32 = arith.constant 0 : i32
    %c0_i32_0 = arith.constant 0 : i32
    %c0_i32_1 = arith.constant 0 : i32
    return %c0_i32, %c0_i32_0 : i32, i32
  }
  func.func @transform_7(%arg0: i32) -> (i32, i32) {
    %c0_i32 = arith.constant 0 : i32
    %c0_i32_0 = arith.constant 0 : i32
    %c0_i32_1 = arith.constant 0 : i32
    return %c0_i32, %c0_i32_0 : i32, i32
  }
}

</mosaic_0001>

<llo_original>
// kernel: mculora_linear_forward.1
$region0: #{mculora_linear_forward.1}
  #allocation0 [shape = 'u32[]', space=smem, size = 0x4, offset = 0x4, fixed_abs, tag = 'smem constant byte address 0x4 - core index']
  #allocation1 [shape = 'u32[144,128]{1,0:T(1,128)}', space=vmem, size = 0x12000, scoped, tag = 'internal scratch']
  %s0 = inlined_call_operand.vmem [shape: f32[8,32], index: 0, kind: input, shape index: {}]
  %s1 = inlined_call_operand.vmem [shape: f32[32,32], index: 1, kind: input, shape index: {}]
  %s2 = inlined_call_operand.vmem [shape: f32[1,32], index: 2, kind: input, shape index: {}]
  %s3 = inlined_call_operand.vmem [shape: f32[32,36], index: 3, kind: input, shape index: {}]
  %s4 = inlined_call_operand.vmem [shape: f32[1,36], index: 4, kind: input, shape index: {}]
  %s5 = inlined_call_operand.vmem [shape: f32[36,288], index: 5, kind: input, shape index: {}]
  %s6 = inlined_call_operand.hbm [shape: f32[8,32], index: 6, kind: output, shape index: {0}]
  %s7 = inlined_call_operand.vmem [shape: f32[8,256], index: 7, kind: output, shape index: {1}]
  %8 = xla_tuple %s6, %s7
  %s9 = sld [smem:[#allocation0]]
  $region42: #{mculora_linear_forward.1} parent=0
    _
  %s11 = ssub.s32 1, %s9
  %s12 = scalar_select 0, %s11, %s9
  $region1: #{mculora_linear_forward.1} parent=0
    #allocation2 [shape = 'u8[4096]{0}', space=vmem, size = 0x1000, scoped, tag = 'output window, operand 0, single buffered']
    #allocation3 [shape = 's32[1]{0}', space=sflag, size = 0x4, scoped, tag = 'scoped memory for mculora_linear_forward.1']
    %13 = vsyncpa [#allocation3], 0
    // Predicated region
    $region2: #{mculora_linear_forward.1} parent=1 // pred_check
      _
    $region3: #{mculora_linear_forward.1} parent=1 // pred_check_branch
      %15 = sbr.rel (0) target = $region5
    $region4: #{mculora_linear_forward.1} parent=1 // pred_region
      _
    $region5: #{mculora_linear_forward.1} parent=1 // pred_fallthru
      _
    // Predicated region
    $region6: #{mculora_linear_forward.1} parent=1 // pred_check
      _
    $region7: #{mculora_linear_forward.1} parent=1 // pred_check_branch
      %17 = sbr.rel (0) target = $region9
    $region8: #{mculora_linear_forward.1} parent=1 // pred_region
      _
    $region9: #{mculora_linear_forward.1} parent=1 // pred_fallthru
      _
    // Predicated region
    $region10: #{mculora_linear_forward.1} parent=1 // pred_check
      _
    $region11: #{mculora_linear_forward.1} parent=1 // pred_check_branch
      %19 = sbr.rel (0) target = $region13
    $region12: #{mculora_linear_forward.1} parent=1 // pred_region
      _
    $region13: #{mculora_linear_forward.1} parent=1 // pred_fallthru
      _
    // Predicated region
    $region14: #{mculora_linear_forward.1} parent=1 // pred_check
      _
    $region15: #{mculora_linear_forward.1} parent=1 // pred_check_branch
      %21 = sbr.rel (0) target = $region17
    $region16: #{mculora_linear_forward.1} parent=1 // pred_region
      _
    $region17: #{mculora_linear_forward.1} parent=1 // pred_fallthru
      _
    // Predicated region
    $region18: #{mculora_linear_forward.1} parent=1 // pred_check
      _
    $region19: #{mculora_linear_forward.1} parent=1 // pred_check_branch
      %23 = sbr.rel (0) target = $region21
    $region20: #{mculora_linear_forward.1} parent=1 // pred_region
      _
    $region21: #{mculora_linear_forward.1} parent=1 // pred_fallthru
      _
    // Predicated region
    $region22: #{mculora_linear_forward.1} parent=1 // pred_check
      _
    $region23: #{mculora_linear_forward.1} parent=1 // pred_check_branch
      %25 = sbr.rel (0) target = $region25
    $region24: #{mculora_linear_forward.1} parent=1 // pred_region
      _
    $region25: #{mculora_linear_forward.1} parent=1 // pred_fallthru
      _
    %v26 = vld [vmem:[%s0] sm:$0xff]
    %v27 = vld [vmem:[%s3] sm:$0xff]
    %v28 = vld [vmem:[%s3 + $0x8] sm:$0xff]
    %v29 = vld [vmem:[%s3 + $0x10] sm:$0xff]
    %v30 = vld [vmem:[%s3 + $0x18] sm:$0xff]
    %vm31 = vcmask 261120
    %v33 = vsel %vm31, %v26, 0
    %35 = vmatprep.subr.mxu0 0.0
    %36 = vmatpush1.msra.mxu0 %v27
    %37 = vmatprep.subr.mxu0 0.0
    %38 = vmatpush1.msra.mxu0 %v28
    %39 = vmatprep.subr.mxu0 0.0
    %40 = vmatpush1.msra.mxu0 %v29
    %41 = vmatprep.subr.mxu0 0.0
    %42 = vmatpush1.msra.mxu0 %v30
    %43 = vmatprep.subr.mxu0 0.0
    %44 = vmatpush1.msra.mxu0 0.0
    %45 = vmatprep.subr.mxu0 0.0
    %46 = vmatpush1.msra.mxu0 0.0
    %47 = vmatprep.subr.mxu0 0.0
    %48 = vmatpush1.msra.mxu0 0.0
    %49 = vmatprep.subr.mxu0 0.0
    %50 = vmatpush1.msra.mxu0 0.0
    %51 = vmatprep.subr.mxu0 0.0
    %52 = vmatpush1.msra.mxu0 0.0
    %53 = vmatprep.subr.mxu0 0.0
    %54 = vmatpush1.msra.mxu0 0.0
    %55 = vmatprep.subr.mxu0 0.0
    %56 = vmatpush1.msra.mxu0 0.0
    %57 = vmatprep.subr.mxu0 0.0
    %58 = vmatpush1.msra.mxu0 0.0
    %59 = vmatprep.subr.mxu0 0.0
    %60 = vmatpush1.msra.mxu0 0.0
    %61 = vmatprep.subr.mxu0 0.0
    %62 = vmatpush1.msra.mxu0 0.0
    %63 = vmatprep.subr.mxu0 0.0
    %64 = vmatpush1.msra.mxu0 0.0
    %65 = vmatprep.subr.mxu0 0.0
    %66 = vmatpush1.msra.mxu0 0.0
    %67 = vmatprep.subr.mxu0 0.0
    %68 = vmatpush1.msra.mxu0 0.0
    %69 = vmatprep.subr.mxu0 0.0
    %70 = vmatpush1.msra.mxu0 0.0
    %71 = vmatprep.subr.mxu0 0.0
    %72 = vmatpush1.msra.mxu0 0.0
    %73 = vmatprep.subr.mxu0 0.0
    %74 = vmatpush1.msra.mxu0 0.0
    %75 = vmatprep.subr.mxu0 0.0
    %76 = vmatpush1.msra.mxu0 0.0
    %77 = vmatprep.subr.mxu0 0.0
    %78 = vmatpush1.msra.mxu0 0.0
    %79 = vmatprep.subr.mxu0 0.0
    %80 = vmatpush1.msra.mxu0 0.0
    %81 = vmatprep.subr.mxu0 0.0
    %82 = vmatpush1.msra.mxu0 0.0
    %83 = vmatprep.subr.mxu0 0.0
    %84 = vmatpush1.msra.mxu0 0.0
    %85 = vmatprep.subr.mxu0 0.0
    %86 = vmatpush1.msra.mxu0 0.0
    %87 = vmatprep.subr.mxu0 0.0
    %88 = vmatpush1.msra.mxu0 0.0
    %89 = vmatprep.subr.mxu0 0.0
    %90 = vmatpush1.msra.mxu0 0.0
    %91 = vmatprep.subr.mxu0 0.0
    %92 = vmatpush1.msra.mxu0 0.0
    %93 = vmatprep.subr.mxu0 0.0
    %94 = vmatpush1.msra.mxu0 0.0
    %95 = vmatprep.subr.mxu0 0.0
    %96 = vmatpush1.msra.mxu0 0.0
    %97 = vmatprep.subr.mxu0 0.0
    %98 = vmatpush1.msra.mxu0 0.0
    %99 = vmatprep.mubr.f32.mxu0 0.0
    %100 = vmatmul.mubr.f32.gmra.mrb[0].mxu0 %v33
    %v101 = vpop.f32.mrb[0].mxu0
    %v102 = vadd.f32 0.0, %v101
    %v103 = vpop.f32.mrb[0].mxu0
    %104 = vdwg.mxu0
    %v105 = vld [vmem:[%s4] sm:$0x1]
    %v107 = vlaneseq
    %v108 = vshrl.u32 %v107, 7
    %v109 = vsub.s32 0, %v108
    %v110 = vrot.slane %v105, %v109
    %v112 = vmul.f32 %v102, %v110
    %v113 = vld [vmem:[%s5] sm:$0xff]
    %v114 = vld [vmem:[%s5 + $0x8] sm:$0xff]
    %v115 = vld [vmem:[%s5 + $0x10] sm:$0xff]
    %v116 = vld [vmem:[%s5 + $0x18] sm:$0xff]
    %v117 = vld [vmem:[%s5 + $0x20] sm:$0xff]
    %v118 = vld [vmem:[%s5 + $0x28] sm:$0xff]
    %v119 = vld [vmem:[%s5 + $0x30] sm:$0xff]
    %v120 = vld [vmem:[%s5 + $0x38] sm:$0xff]
    %v121 = vld [vmem:[%s5 + $0x40] sm:$0xff]
    %v122 = vld [vmem:[%s5 + $0x48] sm:$0xff]
    %v123 = vld [vmem:[%s5 + $0x50] sm:$0xff]
    %v124 = vld [vmem:[%s5 + $0x58] sm:$0xff]
    %v125 = vld [vmem:[%s5 + $0x60] sm:$0xf]
    %v126 = vld [vmem:[%s5 + $0x68] sm:$0xf]
    %v127 = vld [vmem:[%s5 + $0x70] sm:$0xf]
    %vm128 = vcmask 293888
    %v130 = vsel %vm128, %v112, 0
    %vm132 = vcmask 1043456
    %v134 = vsel %vm132, %v125, 0
    %v137 = vsel %vm132, %v126, 0
    %v140 = vsel %vm132, %v127, 0
    %142 = vmatprep.subr.mxu0 %v114
    %143 = vmatpush1.msra.mxu0 %v113
    %144 = vmatprep.subr.mxu0 %v117
    %145 = vmatpush1.msra.mxu0 %v116
    %146 = vmatprep.subr.mxu0 %v120
    %147 = vmatpush1.msra.mxu0 %v119
    %148 = vmatprep.subr.mxu0 %v123
    %149 = vmatpush1.msra.mxu0 %v122
    %150 = vmatprep.subr.mxu0 %v137
    %151 = vmatpush1.msra.mxu0 %v134
    %152 = vmatprep.subr.mxu0 0.0
    %153 = vmatpush1.msra.mxu0 0.0
    %154 = vmatprep.subr.mxu0 0.0
    %155 = vmatpush1.msra.mxu0 0.0
    %156 = vmatprep.subr.mxu0 0.0
    %157 = vmatpush1.msra.mxu0 0.0
    %158 = vmatprep.subr.mxu0 0.0
    %159 = vmatpush1.msra.mxu0 0.0
    %160 = vmatprep.subr.mxu0 0.0
    %161 = vmatpush1.msra.mxu0 0.0
    %162 = vmatprep.subr.mxu0 0.0
    %163 = vmatpush1.msra.mxu0 0.0
    %164 = vmatprep.subr.mxu0 0.0
    %165 = vmatpush1.msra.mxu0 0.0
    %166 = vmatprep.subr.mxu0 0.0
    %167 = vmatpush1.msra.mxu0 0.0
    %168 = vmatprep.subr.mxu0 0.0
    %169 = vmatpush1.msra.mxu0 0.0
    %170 = vmatprep.subr.mxu0 0.0
    %171 = vmatpush1.msra.mxu0 0.0
    %172 = vmatprep.subr.mxu0 0.0
    %173 = vmatpush1.msra.mxu0 0.0
    %174 = vmatprep.subr.mxu0 0.0
    %175 = vmatpush1.msra.mxu0 0.0
    %176 = vmatprep.subr.mxu0 0.0
    %177 = vmatpush1.msra.mxu0 0.0
    %178 = vmatprep.subr.mxu0 0.0
    %179 = vmatpush1.msra.mxu0 0.0
    %180 = vmatprep.subr.mxu0 0.0
    %181 = vmatpush1.msra.mxu0 0.0
    %182 = vmatprep.subr.mxu0 0.0
    %183 = vmatpush1.msra.mxu0 0.0
    %184 = vmatprep.subr.mxu0 0.0
    %185 = vmatpush1.msra.mxu0 0.0
    %186 = vmatprep.subr.mxu0 0.0
    %187 = vmatpush1.msra.mxu0 0.0
    %188 = vmatprep.subr.mxu0 0.0
    %189 = vmatpush1.msra.mxu0 0.0
    %190 = vmatprep.subr.mxu0 0.0
    %191 = vmatpush1.msra.mxu0 0.0
    %192 = vmatprep.subr.mxu0 0.0
    %193 = vmatpush1.msra.mxu0 0.0
    %194 = vmatprep.subr.mxu0 0.0
    %195 = vmatpush1.msra.mxu0 0.0
    %196 = vmatprep.subr.mxu0 0.0
    %197 = vmatpush1.msra.mxu0 0.0
    %198 = vmatprep.subr.mxu0 0.0
    %199 = vmatpush1.msra.mxu0 0.0
    %200 = vmatprep.subr.mxu0 0.0
    %201 = vmatpush1.msra.mxu0 0.0
    %202 = vmatprep.subr.mxu0 0.0
    %203 = vmatpush1.msra.mxu0 0.0
    %204 = vmatprep.subr.mxu0 0.0
    %205 = vmatpush1.msra.mxu0 0.0
    %206 = vmatprep.mubr.f32.mxu0 0.0
    %207 = vmatmul.mubr.f32.gmra.mrb[0].mxu0 %v130
    %v208 = vpop.f32.mrb[0].mxu0
    %v209 = vadd.f32 0.0, %v208
    %v210 = vpop.f32.mrb[0].mxu0
    %v211 = vadd.f32 0.0, %v210
    %212 = vdwg.mxu0
    %213 = vmatprep.subr.mxu0 0.0
    %214 = vmatpush1.msra.mxu0 %v115
    %215 = vmatprep.subr.mxu0 0.0
    %216 = vmatpush1.msra.mxu0 %v118
    %217 = vmatprep.subr.mxu0 0.0
    %218 = vmatpush1.msra.mxu0 %v121
    %219 = vmatprep.subr.mxu0 0.0
    %220 = vmatpush1.msra.mxu0 %v124
    %221 = vmatprep.subr.mxu0 0.0
    %222 = vmatpush1.msra.mxu0 %v140
    %223 = vmatprep.subr.mxu0 0.0
    %224 = vmatpush1.msra.mxu0 0.0
    %225 = vmatprep.subr.mxu0 0.0
    %226 = vmatpush1.msra.mxu0 0.0
    %227 = vmatprep.subr.mxu0 0.0
    %228 = vmatpush1.msra.mxu0 0.0
    %229 = vmatprep.subr.mxu0 0.0
    %230 = vmatpush1.msra.mxu0 0.0
    %231 = vmatprep.subr.mxu0 0.0
    %232 = vmatpush1.msra.mxu0 0.0
    %233 = vmatprep.subr.mxu0 0.0
    %234 = vmatpush1.msra.mxu0 0.0
    %235 = vmatprep.subr.mxu0 0.0
    %236 = vmatpush1.msra.mxu0 0.0
    %237 = vmatprep.subr.mxu0 0.0
    %238 = vmatpush1.msra.mxu0 0.0
    %239 = vmatprep.subr.mxu0 0.0
    %240 = vmatpush1.msra.mxu0 0.0
    %241 = vmatprep.subr.mxu0 0.0
    %242 = vmatpush1.msra.mxu0 0.0
    %243 = vmatprep.subr.mxu0 0.0
    %244 = vmatpush1.msra.mxu0 0.0
    %245 = vmatprep.subr.mxu0 0.0
    %246 = vmatpush1.msra.mxu0 0.0
    %247 = vmatprep.subr.mxu0 0.0
    %248 = vmatpush1.msra.mxu0 0.0
    %249 = vmatprep.subr.mxu0 0.0
    %250 = vmatpush1.msra.mxu0 0.0
    %251 = vmatprep.subr.mxu0 0.0
    %252 = vmatpush1.msra.mxu0 0.0
    %253 = vmatprep.subr.mxu0 0.0
    %254 = vmatpush1.msra.mxu0 0.0
    %255 = vmatprep.subr.mxu0 0.0
    %256 = vmatpush1.msra.mxu0 0.0
    %257 = vmatprep.subr.mxu0 0.0
    %258 = vmatpush1.msra.mxu0 0.0
    %259 = vmatprep.subr.mxu0 0.0
    %260 = vmatpush1.msra.mxu0 0.0
    %261 = vmatprep.subr.mxu0 0.0
    %262 = vmatpush1.msra.mxu0 0.0
    %263 = vmatprep.subr.mxu0 0.0
    %264 = vmatpush1.msra.mxu0 0.0
    %265 = vmatprep.subr.mxu0 0.0
    %266 = vmatpush1.msra.mxu0 0.0
    %267 = vmatprep.subr.mxu0 0.0
    %268 = vmatpush1.msra.mxu0 0.0
    %269 = vmatprep.subr.mxu0 0.0
    %270 = vmatpush1.msra.mxu0 0.0
    %271 = vmatprep.subr.mxu0 0.0
    %272 = vmatpush1.msra.mxu0 0.0
    %273 = vmatprep.subr.mxu0 0.0
    %274 = vmatpush1.msra.mxu0 0.0
    %275 = vmatprep.subr.mxu0 0.0
    %276 = vmatpush1.msra.mxu0 0.0
    %277 = vmatprep.mubr.f32.mxu0 0.0
    %278 = vmatmul.mubr.f32.gmra.mrb[0].mxu0 %v130
    %v279 = vpop.f32.mrb[0].mxu0
    %v280 = vadd.f32 0.0, %v279
    %v281 = vpop.f32.mrb[0].mxu0
    %282 = vdwg.mxu0
    %283 = vst [vmem:[%s7] sm:$0xff] %v209
    %284 = vst [vmem:[%s7 + $0x8] sm:$0xff] %v211
    %v285 = vld [vmem:[%s1] sm:$0xff]
    %v286 = vld [vmem:[%s1 + $0x8] sm:$0xff]
    %v287 = vld [vmem:[%s1 + $0x10] sm:$0xff]
    %v288 = vld [vmem:[%s1 + $0x18] sm:$0xff]
    %v289 = vld [vmem:[%s2] sm:$0x1]
    %v291 = vlaneseq
    %v292 = vshrl.u32 %v291, 7
    %v293 = vsub.s32 0, %v292
    %v294 = vrot.slane %v289, %v293
    %296 = vmatprep.subr.mxu0 0.0
    %297 = vmatpush1.msra.mxu0 %v285
    %298 = vmatprep.subr.mxu0 0.0
    %299 = vmatpush1.msra.mxu0 %v286
    %300 = vmatprep.subr.mxu0 0.0
    %301 = vmatpush1.msra.mxu0 %v287
    %302 = vmatprep.subr.mxu0 0.0
    %303 = vmatpush1.msra.mxu0 %v288
    %304 = vmatprep.subr.mxu0 0.0
    %305 = vmatpush1.msra.mxu0 0.0
    %306 = vmatprep.subr.mxu0 0.0
    %307 = vmatpush1.msra.mxu0 0.0
    %308 = vmatprep.subr.mxu0 0.0
    %309 = vmatpush1.msra.mxu0 0.0
    %310 = vmatprep.subr.mxu0 0.0
    %311 = vmatpush1.msra.mxu0 0.0
    %312 = vmatprep.subr.mxu0 0.0
    %313 = vmatpush1.msra.mxu0 0.0
    %314 = vmatprep.subr.mxu0 0.0
    %315 = vmatpush1.msra.mxu0 0.0
    %316 = vmatprep.subr.mxu0 0.0
    %317 = vmatpush1.msra.mxu0 0.0
    %318 = vmatprep.subr.mxu0 0.0
    %319 = vmatpush1.msra.mxu0 0.0
    %320 = vmatprep.subr.mxu0 0.0
    %321 = vmatpush1.msra.mxu0 0.0
    %322 = vmatprep.subr.mxu0 0.0
    %323 = vmatpush1.msra.mxu0 0.0
    %324 = vmatprep.subr.mxu0 0.0
    %325 = vmatpush1.msra.mxu0 0.0
    %326 = vmatprep.subr.mxu0 0.0
    %327 = vmatpush1.msra.mxu0 0.0
    %328 = vmatprep.subr.mxu0 0.0
    %329 = vmatpush1.msra.mxu0 0.0
    %330 = vmatprep.subr.mxu0 0.0
    %331 = vmatpush1.msra.mxu0 0.0
    %332 = vmatprep.subr.mxu0 0.0
    %333 = vmatpush1.msra.mxu0 0.0
    %334 = vmatprep.subr.mxu0 0.0
    %335 = vmatpush1.msra.mxu0 0.0
    %336 = vmatprep.subr.mxu0 0.0
    %337 = vmatpush1.msra.mxu0 0.0
    %338 = vmatprep.subr.mxu0 0.0
    %339 = vmatpush1.msra.mxu0 0.0
    %340 = vmatprep.subr.mxu0 0.0
    %341 = vmatpush1.msra.mxu0 0.0
    %342 = vmatprep.subr.mxu0 0.0
    %343 = vmatpush1.msra.mxu0 0.0
    %344 = vmatprep.subr.mxu0 0.0
    %345 = vmatpush1.msra.mxu0 0.0
    %346 = vmatprep.subr.mxu0 0.0
    %347 = vmatpush1.msra.mxu0 0.0
    %348 = vmatprep.subr.mxu0 0.0
    %349 = vmatpush1.msra.mxu0 0.0
    %350 = vmatprep.subr.mxu0 0.0
    %351 = vmatpush1.msra.mxu0 0.0
    %352 = vmatprep.subr.mxu0 0.0
    %353 = vmatpush1.msra.mxu0 0.0
    %354 = vmatprep.subr.mxu0 0.0
    %355 = vmatpush1.msra.mxu0 0.0
    %356 = vmatprep.subr.mxu0 0.0
    %357 = vmatpush1.msra.mxu0 0.0
    %358 = vmatprep.subr.mxu0 0.0
    %359 = vmatpush1.msra.mxu0 0.0
    %360 = vmatprep.mubr.f32.mxu0 0.0
    %361 = vmatmul.mubr.f32.gmra.mrb[0].mxu0 %v33
    %v362 = vpop.f32.mrb[0].mxu0
    %v363 = vadd.f32 %v294, %v362
    %v364 = vpop.f32.mrb[0].mxu0
    %365 = vdwg.mxu0
    %v366 = vadd.f32 %v363, %v280
    %367 = vst.msk [vmem:[#allocation2] sm:$0xff] %vm31, %v366
    // Predicated region
    $region26: #{mculora_linear_forward.1} parent=1 // pred_check
      _
    $region27: #{mculora_linear_forward.1} parent=1 // pred_check_branch
      %369 = sbr.rel (0) target = $region29
    $region28: #{mculora_linear_forward.1} parent=1 // pred_region
      %s371 = ssub.s32 128, 128
      %372 = vsyncadd [#allocation3], %s371
      %s374 = sshll.u32 [#allocation2], 4
      %s375 = int_to_ptr.vmem [resolvable:$true] %s374
      %377 = dma.vmem_to_hbm [thread:$0]  %s375, 128, %s6, [#allocation3]
    $region29: #{mculora_linear_forward.1} parent=1 // pred_fallthru
      _
    // Predicated region
    $region30: #{mculora_linear_forward.1} parent=1 // pred_check
      _
    $region31: #{mculora_linear_forward.1} parent=1 // pred_check_branch
      %379 = sbr.rel (0) target = $region33
    $region32: #{mculora_linear_forward.1} parent=1 // pred_region
      _
    $region33: #{mculora_linear_forward.1} parent=1 // pred_fallthru
      _
    // Predicated region
    $region34: #{mculora_linear_forward.1} parent=1 // pred_check
      _
    $region35: #{mculora_linear_forward.1} parent=1 // pred_check_branch
      %381 = sbr.rel (0) target = $region37
    $region36: #{mculora_linear_forward.1} parent=1 // pred_region
      %382 = dma.done [#allocation3], 128
    $region37: #{mculora_linear_forward.1} parent=1 // pred_fallthru
      _
    // Predicated region
    $region38: #{mculora_linear_forward.1} parent=1 // pred_check
      _
    $region39: #{mculora_linear_forward.1} parent=1 // pred_check_branch
      %384 = sbr.rel (0) target = $region41
    $region40: #{mculora_linear_forward.1} parent=1 // pred_region
      _
    $region41: #{mculora_linear_forward.1} parent=1 // pred_fallthru
      _
    %385 = vsyncpa [#allocation3], 1

</llo_original>
